<compile_context>
chip_gen: v7x
topology: tpu7x:2x2x1
jax: 0.10.0
libtpu: 0.0.40
codegen_flags: <defaults>
</compile_context>

<pallas_src>
import jax
import jax.numpy as jnp
from jax.experimental import pallas as pl
from jax.experimental.pallas import tpu as pltpu

EPS = 1e-5


def _bn_scale_shift_kernel(x_ref, scale_ref, shift_ref, o_ref):
    # x_ref: (R, TL); scale_ref/shift_ref: (R, 1) broadcast over lanes.
    o_ref[...] = x_ref[...] * scale_ref[...] + shift_ref[...]


def _pick_lane_tile(total_lanes, rows, bytes_per_elem=4,
                    per_buffer_budget=1 << 20, max_lanes=32768):
    """Largest multiple-of-128 tile dividing `total_lanes` within the budget."""
    if total_lanes % 128 != 0:
        return total_lanes  # tiny/irregular: single full-extent block (legal)
    tl = min(
        total_lanes,
        max_lanes,
        max(128, (per_buffer_budget // (rows * bytes_per_elem)) // 128 * 128),
    )
    while total_lanes % tl != 0:  # terminates at 128 (128 divides total_lanes)
        tl -= 128
    return tl


def batchnorm2d_eval(x_nchw, running_mean, running_var, weight, bias,
                     *, use_pallas=None):
    """BatchNorm2d eval forward.  x_nchw: (N, C, H, W)."""
    N, C, H, W = x_nchw.shape
    x_f32 = x_nchw.astype(jnp.float32)

    # Fold params (C-length work; this is NOT the "pre-scale the input tensor"
    # anti-pattern -- only the tiny parameter vectors are touched).
    scale = weight.astype(jnp.float32) * jax.lax.rsqrt(
        running_var.astype(jnp.float32) + EPS)
    shift = bias.astype(jnp.float32) - running_mean.astype(jnp.float32) * scale

    if use_pallas is None:
        # pallas_call fixed cost dwarfs moving a few dozen bytes; let XLA fuse.
        use_pallas = x_f32.size >= (1 << 14)
    if not use_pallas:
        y = x_f32 * scale[None, :, None, None] + shift[None, :, None, None]
        return y.astype(x_nchw.dtype)

    R, L = N * C, H * W
    x_rl = x_f32.reshape(R, L)                    # free view: NCHW is contiguous
    scale_col = jnp.tile(scale, N).reshape(R, 1)  # per-row params (R elements)
    shift_col = jnp.tile(shift, N).reshape(R, 1)

    tl = _pick_lane_tile(L, R)
    grid = (L // tl,)

    out_rl = pl.pallas_call(
        _bn_scale_shift_kernel,
        out_shape=jax.ShapeDtypeStruct((R, L), jnp.float32),
        grid=grid,
        in_specs=[
            pl.BlockSpec((R, tl), lambda j: (0, j)),
            pl.BlockSpec((R, 1), lambda j: (0, 0)),  # constant index -> fetched once
            pl.BlockSpec((R, 1), lambda j: (0, 0)),
        ],
        out_specs=pl.BlockSpec((R, tl), lambda j: (0, j)),
        compiler_params=pltpu.CompilerParams(
            dimension_semantics=("parallel",)),
    )(x_rl, scale_col, shift_col)

    return out_rl.reshape(N, C, H, W).astype(x_nchw.dtype)


if __name__ == "__main__":
    in_channels = 3

    # Deterministic parameters, exactly as Net.set_normalization() sets them.
    weight = jnp.ones((in_channels,), jnp.float32)
    bias = jnp.zeros((in_channels,), jnp.float32)
    running_mean = jnp.zeros((in_channels,), jnp.float32)
    running_var = jnp.ones((in_channels,), jnp.float32)

    def reference(x):
        inv = jax.lax.rsqrt(running_var + EPS)
        return ((x - running_mean[None, :, None, None])
                * inv[None, :, None, None]
                * weight[None, :, None, None]
                + bias[None, :, None, None])

    key = jax.random.PRNGKey(0)
    k1, k2 = jax.random.split(key)

    # (a) The module's own shape (1, 3, 2, 2), forced through the Pallas path.
    x_tiny = jax.random.uniform(k1, (1, in_channels, 2, 2), dtype=jnp.float32)
    out_tiny = jax.block_until_ready(
        batchnorm2d_eval(x_tiny, running_mean, running_var, weight, bias,
                         use_pallas=True))
    assert out_tiny.shape == x_tiny.shape and out_tiny.dtype == x_tiny.dtype
    assert jnp.allclose(out_tiny, reference(x_tiny), atol=1e-5, rtol=1e-5)

    # (b) A larger shape that exercises the lane-dense multi-step tiled grid.
    x_big = jax.random.uniform(k2, (2, in_channels, 256, 256), dtype=jnp.float32)
    out_big = jax.block_until_ready(
        batchnorm2d_eval(x_big, running_mean, running_var, weight, bias,
                         use_pallas=True))
    assert out_big.shape == x_big.shape and out_big.dtype == x_big.dtype
    assert jnp.allclose(out_big, reference(x_big), atol=1e-5, rtol=1e-5)

    print("KERNEL_OK")
</pallas_src>

<mosaic_0001>
module attributes {stable_mosaic.version = 11 : i64} {
  func.func @_bn_scale_shift_kernel(%arg0: i32, %arg1: memref<3x4xf32, #tpu.memory_space<vmem>>, %arg2: memref<3x1xf32, #tpu.memory_space<vmem>>, %arg3: memref<3x1xf32, #tpu.memory_space<vmem>>, %arg4: memref<3x4xf32, #tpu.memory_space<vmem>>) attributes {dimension_semantics = [#tpu.dimension_semantics<parallel>], iteration_bounds = array<i64: 1>, scalar_prefetch = 0 : i64, scratch_operands = 0 : i64, tpu.core_type = #tpu.core_type<tc>, window_params = [{transform_indices = @transform_0, window_bounds = array<i64: 3, 4>}, {pipeline_mode = #tpu.pipeline_mode<synchronous>, transform_indices = @transform_1, window_bounds = array<i64: 3, 1>}, {pipeline_mode = #tpu.pipeline_mode<synchronous>, transform_indices = @transform_2, window_bounds = array<i64: 3, 1>}, {transform_indices = @transform_3, window_bounds = array<i64: 3, 4>}]} {
    %c0 = arith.constant 0 : index
    %c0_0 = arith.constant 0 : index
    %0 = vector.load %arg1[%c0, %c0_0] : memref<3x4xf32, #tpu.memory_space<vmem>>, vector<3x4xf32>
    %c0_1 = arith.constant 0 : index
    %c0_2 = arith.constant 0 : index
    %1 = vector.load %arg2[%c0_1, %c0_2] : memref<3x1xf32, #tpu.memory_space<vmem>>, vector<3x1xf32>
    %2 = vector.broadcast %1 : vector<3x1xf32> to vector<3x4xf32>
    %3 = arith.mulf %0, %2 : vector<3x4xf32>
    %c0_3 = arith.constant 0 : index
    %c0_4 = arith.constant 0 : index
    %4 = vector.load %arg3[%c0_3, %c0_4] : memref<3x1xf32, #tpu.memory_space<vmem>>, vector<3x1xf32>
    %5 = vector.broadcast %4 : vector<3x1xf32> to vector<3x4xf32>
    %6 = arith.addf %3, %5 : vector<3x4xf32>
    %c0_5 = arith.constant 0 : index
    %c0_6 = arith.constant 0 : index
    %7 = vector.load %arg4[%c0_5, %c0_6] : memref<3x4xf32, #tpu.memory_space<vmem>>, vector<3x4xf32>
    tpu.vector_store %arg4[%c0_5, %c0_6], %6 {strides = array<i32>} : memref<3x4xf32, #tpu.memory_space<vmem>>, vector<3x4xf32>,
    return
  }
  func.func @transform_0(%arg0: i32) -> (i32, i32) {
    %c0_i32 = arith.constant 0 : i32
    %c0_i32_0 = arith.constant 0 : i32
    return %c0_i32, %arg0 : i32, i32
  }
  func.func @transform_1(%arg0: i32) -> (i32, i32) {
    %c0_i32 = arith.constant 0 : i32
    %c0_i32_0 = arith.constant 0 : i32
    %c0_i32_1 = arith.constant 0 : i32
    return %c0_i32, %c0_i32_0 : i32, i32
  }
  func.func @transform_2(%arg0: i32) -> (i32, i32) {
    %c0_i32 = arith.constant 0 : i32
    %c0_i32_0 = arith.constant 0 : i32
    %c0_i32_1 = arith.constant 0 : i32
    return %c0_i32, %c0_i32_0 : i32, i32
  }
  func.func @transform_3(%arg0: i32) -> (i32, i32) {
    %c0_i32 = arith.constant 0 : i32
    %c0_i32_0 = arith.constant 0 : i32
    return %c0_i32, %arg0 : i32, i32
  }
}

</mosaic_0001>

<llo_original>
// kernel: tpu_custom_call.1
$region0: #{tpu_custom_call.1}
  #allocation0 [shape = 'u32[]', space=smem, size = 0x4, offset = 0x4, fixed_abs, tag = 'smem constant byte address 0x4 - core index']
  #allocation1 [shape = 'u32[144,128]{1,0:T(1,128)}', space=vmem, size = 0x12000, scoped, tag = 'internal scratch']
  %s0 = inlined_call_operand.vmem [shape: f32[3,4], index: 0, kind: input, shape index: {}]
  %s1 = inlined_call_operand.vmem [shape: f32[3,1], index: 1, kind: input, shape index: {}]
  %s2 = inlined_call_operand.vmem [shape: f32[3,1], index: 2, kind: input, shape index: {}]
  %s3 = inlined_call_operand.hbm [shape: f32[3,4], index: 3, kind: output, shape index: {}]
  %s4 = sld [smem:[#allocation0]]
  $region22: #{tpu_custom_call.1} parent=0
    _
  %s6 = ssub.s32 1, %s4
  %s7 = scalar_select 0, %s6, %s4
  $region1: #{tpu_custom_call.1} parent=0
    #allocation2 [shape = 'u8[2048]{0}', space=vmem, size = 0x800, scoped, tag = 'output window, operand 0, single buffered']
    #allocation3 [shape = 's32[1]{0}', space=sflag, size = 0x4, scoped, tag = 'scoped memory for tpu_custom_call.1']
    %8 = vsyncpa [#allocation3], 0
    // Predicated region
    $region2: #{tpu_custom_call.1} parent=1 // pred_check
      _
    $region3: #{tpu_custom_call.1} parent=1 // pred_check_branch
      %10 = sbr.rel (0) target = $region5
    $region4: #{tpu_custom_call.1} parent=1 // pred_region
      _
    $region5: #{tpu_custom_call.1} parent=1 // pred_fallthru
      _
    // Predicated region
    $region6: #{tpu_custom_call.1} parent=1 // pred_check
      _
    $region7: #{tpu_custom_call.1} parent=1 // pred_check_branch
      %12 = sbr.rel (0) target = $region9
    $region8: #{tpu_custom_call.1} parent=1 // pred_region
      _
    $region9: #{tpu_custom_call.1} parent=1 // pred_fallthru
      _
    // Predicated region
    $region10: #{tpu_custom_call.1} parent=1 // pred_check
      _
    $region11: #{tpu_custom_call.1} parent=1 // pred_check_branch
      %14 = sbr.rel (0) target = $region13
    $region12: #{tpu_custom_call.1} parent=1 // pred_region
      _
    $region13: #{tpu_custom_call.1} parent=1 // pred_fallthru
      _
    %v15 = vld [vmem:[%s0] sm:$0x7]
    %v16 = vld [vmem:[%s1] sm:$0x7]
    %18 = vset.pattern.permute.xlu0 0
    %19 = vperm.xlu0 %18, %v16
    %v20 = vpop.permute.xlu0 %19
    %v22 = vmul.f32 %v15, %v20
    %v23 = vld [vmem:[%s2] sm:$0x7]
    %25 = vset.pattern.permute.xlu0 0
    %26 = vperm.xlu0 %25, %v23
    %v27 = vpop.permute.xlu0 %26
    %v29 = vadd.f32 %v22, %v27
    %vm30 = vcmask 26624
    %31 = vst.msk [vmem:[#allocation2] sm:$0x7] %vm30, %v29
    // Predicated region
    $region14: #{tpu_custom_call.1} parent=1 // pred_check
      _
    $region15: #{tpu_custom_call.1} parent=1 // pred_check_branch
      %33 = sbr.rel (0) target = $region17
    $region16: #{tpu_custom_call.1} parent=1 // pred_region
      %s35 = ssub.s32 64, 64
      %36 = vsyncadd [#allocation3], %s35
      %s38 = sshll.u32 [#allocation2], 4
      %s39 = int_to_ptr.vmem [resolvable:$true] %s38
      %41 = dma.vmem_to_hbm [thread:$0]  %s39, 64, %s3, [#allocation3]
    $region17: #{tpu_custom_call.1} parent=1 // pred_fallthru
      _
    // Predicated region
    $region18: #{tpu_custom_call.1} parent=1 // pred_check
      _
    $region19: #{tpu_custom_call.1} parent=1 // pred_check_branch
      %43 = sbr.rel (0) target = $region21
    $region20: #{tpu_custom_call.1} parent=1 // pred_region
      %44 = dma.done [#allocation3], 64
    $region21: #{tpu_custom_call.1} parent=1 // pred_fallthru
      _
    %45 = vsyncpa [#allocation3], 1

</llo_original>
